<compile_context>
chip_gen: v7x
topology: tpu7x:2x2x1
jax: 0.10.0
libtpu: 0.0.40
codegen_flags: <defaults>
</compile_context>

<pallas_src>
import jax
import jax.numpy as jnp
from jax import lax
from jax.experimental import pallas as pl
from jax.experimental.pallas import tpu as pltpu


# ---------------------------------------------------------------------------
# L_color Pallas kernel
# ---------------------------------------------------------------------------
def _l_color_kernel(x_ref, f_ref, o_ref, acc_ref):
    # x_ref, f_ref : (1, C, TR, L) VMEM tiles (channel planes are dense (TR, L))
    # o_ref        : (1, 1, L) per-batch lane-dense partial sum
    # acc_ref      : (TR, L) f32 VMEM accumulator (persistent across the j axis)
    j = pl.program_id(1)

    @pl.when(j == 0)
    def _init():
        acc_ref[...] = jnp.zeros_like(acc_ref)

    c = x_ref.shape[1]

    # Unrolled per-channel FMA over dense (TR, L) planes: pure VALU, 8/8 vreg use.
    x0 = x_ref[0, 0].astype(jnp.float32)
    f0 = f_ref[0, 0].astype(jnp.float32)
    dot = x0 * f0
    sx = x0 * x0
    sf = f0 * f0
    for ch in range(1, c):
        xc = x_ref[0, ch].astype(jnp.float32)
        fc = f_ref[0, ch].astype(jnp.float32)
        dot = dot + xc * fc
        sx = sx + xc * xc
        sf = sf + fc * fc

    # max(sqrt(s), 1e-12) == sqrt(max(s, 1e-24)) -> single EUP rsqrt, exact eps clamp.
    eps2 = jnp.float32(1e-24)
    cos = dot * lax.rsqrt(jnp.maximum(sx, eps2) * jnp.maximum(sf, eps2))

    acc_ref[...] += jnp.float32(1.0) - cos

    @pl.when(j == pl.num_programs(1) - 1)
    def _finalize():
        # One cross-sublane reduction per batch; output stays lane-dense (L wide).
        o_ref[...] = jnp.sum(acc_ref[...], axis=0, keepdims=True).reshape(o_ref.shape)


def _pick_row_tile(rows, c, lanes, itemsize):
    """Largest legal row-tile given a conservative VMEM budget.

    VMEM cost per sublane-row of block:
      2 inputs x 2 pipeline buffers x C x lanes x itemsize  +  lanes x 4 (f32 acc).
    Budget ~20 MiB keeps headroom under the 32 MiB scoped limit (safe on
    v5e/v6e and on v7x's 64 MiB physical VMEM).
    """
    bytes_per_row = 4 * c * lanes * itemsize + lanes * 4
    budget = 20 * 1024 * 1024
    tr_max = max(1, budget // bytes_per_row)

    if rows <= tr_max:
        return rows  # whole image per grid step

    best = None
    for cand in range(8, int(tr_max) + 1, 8):  # multiple-of-8 sublane tiles only
        if rows % cand == 0:
            best = cand
    if best is not None:
        return best
    # TODO(synk): no multiple-of-8 divisor fits the budget (pathological H*W);
    # fall back to the whole image per step.
    return rows


def l_color(image_x, image_fused):
    """image_x, image_fused: (N, C, H, W) -> scalar loss (float32)."""
    assert image_x.shape == image_fused.shape
    n, c, h, w = image_x.shape
    hw = h * w

    if hw % 128 == 0:
        lanes, rows = 128, hw // 128
    else:
        # Rare fallback: whole spatial axis on lanes (masked but correct).
        lanes, rows = hw, 1

    itemsize = jnp.dtype(image_x.dtype).itemsize
    tr = _pick_row_tile(rows, c, lanes, itemsize)

    x4 = image_x.reshape(n, c, rows, lanes)
    f4 = image_fused.reshape(n, c, rows, lanes)

    partial = pl.pallas_call(
        _l_color_kernel,
        out_shape=jax.ShapeDtypeStruct((n, 1, lanes), jnp.float32),
        grid_spec=pltpu.PrefetchScalarGridSpec(
            num_scalar_prefetch=0,
            grid=(n, rows // tr),
            in_specs=[
                pl.BlockSpec((1, c, tr, lanes), lambda i, j: (i, 0, j, 0)),
                pl.BlockSpec((1, c, tr, lanes), lambda i, j: (i, 0, j, 0)),
            ],
            out_specs=pl.BlockSpec((1, 1, lanes), lambda i, j: (i, 0, 0)),
            scratch_shapes=[pltpu.VMEM((tr, lanes), jnp.float32)],
        ),
        compiler_params=pltpu.CompilerParams(
            # Batch axis is parallel (per-batch output rows) -> megacore on v7x.
            dimension_semantics=("parallel", "arbitrary"),
            vmem_limit_bytes=32 * 1024 * 1024,
        ),
    )(x4, f4)

    return jnp.sum(partial) / jnp.float32(n * hw)


# ---------------------------------------------------------------------------
# Remaining fusion_base_loss terms (plain JAX)
# ---------------------------------------------------------------------------
_SOBEL_X = jnp.array([[-1.0, 0.0, 1.0], [-2.0, 0.0, 2.0], [-1.0, 0.0, 1.0]],
                     dtype=jnp.float32).reshape(1, 1, 3, 3)
_SOBEL_Y = jnp.array([[-1.0, -2.0, -1.0], [0.0, 0.0, 0.0], [1.0, 2.0, 1.0]],
                     dtype=jnp.float32).reshape(1, 1, 3, 3)


def _rgb_to_y(image):
    r = image[:, 0:1]
    g = image[:, 1:2]
    b = image[:, 2:3]
    y = 0.299 * r + 0.587 * g + 0.114 * b
    cb = 0.564 * (b - y)
    cr = 0.713 * (r - y)
    return y, jnp.concatenate([cb, cr], axis=1)


def _sobel_gradients(img):
    # img: (N, 1, H, W); replicate pad + 3x3 Sobel, abs.
    padded = jnp.pad(img, ((0, 0), (0, 0), (1, 1), (1, 1)), mode="edge")
    kx = _SOBEL_X.astype(img.dtype)
    ky = _SOBEL_Y.astype(img.dtype)
    gx = lax.conv_general_dilated(padded, kx, (1, 1), "VALID",
                                  dimension_numbers=("NCHW", "OIHW", "NCHW"))
    gy = lax.conv_general_dilated(padded, ky, (1, 1), "VALID",
                                  dimension_numbers=("NCHW", "OIHW", "NCHW"))
    return jnp.abs(gx), jnp.abs(gy)


def _l_gradient(a_y, b_y, f_y):
    ax, ay = _sobel_gradients(a_y)
    bx, by = _sobel_gradients(b_y)
    fx, fy = _sobel_gradients(f_y)
    return (jnp.mean(jnp.abs(fx - jnp.maximum(ax, bx)))
            + jnp.mean(jnp.abs(fy - jnp.maximum(ay, by))))


def fusion_base_loss(image_a, image_b, image_fused,
                     int_ratio=1, grad_ratio=2, color_ratio=10):
    a_y, _ = _rgb_to_y(image_a)
    b_y, _ = _rgb_to_y(image_b)
    f_y, _ = _rgb_to_y(image_fused)

    loss_int = int_ratio * jnp.mean(jnp.abs(f_y - jnp.maximum(a_y, b_y)))
    loss_grad = grad_ratio * _l_gradient(a_y, b_y, f_y)
    loss_color = color_ratio * l_color(image_a, image_fused)   # Pallas kernel
    total_loss = 10.0 * (loss_int + loss_grad + loss_color)
    return total_loss, loss_int, loss_grad, loss_color


# ---------------------------------------------------------------------------
# Pure-JAX reference (mirrors the PyTorch module)
# ---------------------------------------------------------------------------
def _l_color_ref(x, f):
    eps = 1e-12
    nx = jnp.maximum(jnp.sqrt(jnp.sum(x * x, axis=1, keepdims=True)), eps)
    nf = jnp.maximum(jnp.sqrt(jnp.sum(f * f, axis=1, keepdims=True)), eps)
    cos = jnp.sum((x / nx) * (f / nf), axis=1)
    return jnp.mean(1.0 - cos)


def _fusion_base_loss_ref(image_a, image_b, image_fused,
                          int_ratio=1, grad_ratio=2, color_ratio=10):
    a_y, _ = _rgb_to_y(image_a)
    b_y, _ = _rgb_to_y(image_b)
    f_y, _ = _rgb_to_y(image_fused)
    loss_int = int_ratio * jnp.mean(jnp.abs(f_y - jnp.maximum(a_y, b_y)))
    loss_grad = grad_ratio * _l_gradient(a_y, b_y, f_y)
    loss_color = color_ratio * _l_color_ref(image_a, image_fused)
    total_loss = 10.0 * (loss_int + loss_grad + loss_color)
    return total_loss, loss_int, loss_grad, loss_color


if __name__ == "__main__":
    key = jax.random.PRNGKey(0)
    ka, kb, kf = jax.random.split(key, 3)
    shape = (2, 3, 16, 16)   # batch=2, RGB, 16x16 spatial
    img_a = jax.random.uniform(ka, shape, dtype=jnp.float32)
    img_b = jax.random.uniform(kb, shape, dtype=jnp.float32)
    img_f = jax.random.uniform(kf, shape, dtype=jnp.float32)

    out = jax.block_until_ready(fusion_base_loss(img_a, img_b, img_f))
    ref = jax.block_until_ready(_fusion_base_loss_ref(img_a, img_b, img_f))
    total, l_int, l_grad, l_col = out
    r_total, r_int, r_grad, r_col = ref

    # Only the color term goes through the Pallas kernel (rsqrt vs sqrt+div is a
    # few-ulp difference); keep a small but meaningful tolerance.
    assert jnp.allclose(l_col, r_col, rtol=2e-3, atol=1e-5), (l_col, r_col)
    assert jnp.allclose(l_int, r_int, rtol=1e-5, atol=1e-6), (l_int, r_int)
    assert jnp.allclose(l_grad, r_grad, rtol=1e-5, atol=1e-6), (l_grad, r_grad)
    assert jnp.allclose(total, r_total, rtol=2e-3, atol=1e-5), (total, r_total)
    print("KERNEL_OK")
</pallas_src>

<mosaic_0001>
module attributes {stable_mosaic.version = 11 : i64} {
  func.func @_l_color_kernel(%arg0: i32, %arg1: i32, %arg2: memref<1x3x2x128xf32, #tpu.memory_space<vmem>>, %arg3: memref<1x3x2x128xf32, #tpu.memory_space<vmem>>, %arg4: memref<1x1x128xf32, #tpu.memory_space<vmem>>, %arg5: memref<2x128xf32, #tpu.memory_space<vmem>>) attributes {dimension_semantics = [#tpu.dimension_semantics<parallel>, #tpu.dimension_semantics<arbitrary>], iteration_bounds = array<i64: 2, 1>, scalar_prefetch = 0 : i64, scratch_operands = 1 : i64, tpu.core_type = #tpu.core_type<tc>, window_params = [{transform_indices = @transform_0, window_bounds = array<i64: 1, 3, 2, 128>}, {transform_indices = @transform_1, window_bounds = array<i64: 1, 3, 2, 128>}, {transform_indices = @transform_2, window_bounds = array<i64: 1, 1, 128>}]} {
    %c0_i32 = arith.constant 0 : i32
    %0 = arith.cmpi eq, %arg1, %c0_i32 : i32
    %1 = arith.extui %0 : i1 to i32
    %c0_i32_0 = arith.constant 0 : i32
    %2 = arith.cmpi ne, %1, %c0_i32_0 : i32
    scf.if %2 {
      %cst_30 = arith.constant 0.000000e+00 : f32
      %45 = vector.broadcast %cst_30 : f32 to vector<2x128xf32>
      %c0_31 = arith.constant 0 : index
      %c0_32 = arith.constant 0 : index
      %46 = vector.load %arg5[%c0_31, %c0_32] : memref<2x128xf32, #tpu.memory_space<vmem>>, vector<2x128xf32>
      tpu.vector_store %arg5[%c0_31, %c0_32], %45 {strides = array<i32>} : memref<2x128xf32, #tpu.memory_space<vmem>>, vector<2x128xf32>,
    } else {
    }
    %c0 = arith.constant 0 : index
    %c0_1 = arith.constant 0 : index
    %c0_2 = arith.constant 0 : index
    %c0_3 = arith.constant 0 : index
    %3 = vector.load %arg2[%c0, %c0_1, %c0_2, %c0_3] : memref<1x3x2x128xf32, #tpu.memory_space<vmem>>, vector<1x1x2x128xf32>
    %4 = vector.shape_cast %3 : vector<1x1x2x128xf32> to vector<2x128xf32>
    %c0_4 = arith.constant 0 : index
    %c0_5 = arith.constant 0 : index
    %c0_6 = arith.constant 0 : index
    %c0_7 = arith.constant 0 : index
    %5 = vector.load %arg3[%c0_4, %c0_5, %c0_6, %c0_7] : memref<1x3x2x128xf32, #tpu.memory_space<vmem>>, vector<1x1x2x128xf32>
    %6 = vector.shape_cast %5 : vector<1x1x2x128xf32> to vector<2x128xf32>
    %7 = arith.mulf %4, %6 : vector<2x128xf32>
    %8 = arith.mulf %4, %4 : vector<2x128xf32>
    %9 = arith.mulf %6, %6 : vector<2x128xf32>
    %c0_8 = arith.constant 0 : index
    %c1 = arith.constant 1 : index
    %c0_9 = arith.constant 0 : index
    %c0_10 = arith.constant 0 : index
    %10 = vector.load %arg2[%c0_8, %c1, %c0_9, %c0_10] : memref<1x3x2x128xf32, #tpu.memory_space<vmem>>, vector<1x1x2x128xf32>
    %11 = vector.shape_cast %10 : vector<1x1x2x128xf32> to vector<2x128xf32>
    %c0_11 = arith.constant 0 : index
    %c1_12 = arith.constant 1 : index
    %c0_13 = arith.constant 0 : index
    %c0_14 = arith.constant 0 : index
    %12 = vector.load %arg3[%c0_11, %c1_12, %c0_13, %c0_14] : memref<1x3x2x128xf32, #tpu.memory_space<vmem>>, vector<1x1x2x128xf32>
    %13 = vector.shape_cast %12 : vector<1x1x2x128xf32> to vector<2x128xf32>
    %14 = arith.mulf %11, %13 : vector<2x128xf32>
    %15 = arith.addf %7, %14 : vector<2x128xf32>
    %16 = arith.mulf %11, %11 : vector<2x128xf32>
    %17 = arith.addf %8, %16 : vector<2x128xf32>
    %18 = arith.mulf %13, %13 : vector<2x128xf32>
    %19 = arith.addf %9, %18 : vector<2x128xf32>
    %c0_15 = arith.constant 0 : index
    %c2 = arith.constant 2 : index
    %c0_16 = arith.constant 0 : index
    %c0_17 = arith.constant 0 : index
    %20 = vector.load %arg2[%c0_15, %c2, %c0_16, %c0_17] : memref<1x3x2x128xf32, #tpu.memory_space<vmem>>, vector<1x1x2x128xf32>
    %21 = vector.shape_cast %20 : vector<1x1x2x128xf32> to vector<2x128xf32>
    %c0_18 = arith.constant 0 : index
    %c2_19 = arith.constant 2 : index
    %c0_20 = arith.constant 0 : index
    %c0_21 = arith.constant 0 : index
    %22 = vector.load %arg3[%c0_18, %c2_19, %c0_20, %c0_21] : memref<1x3x2x128xf32, #tpu.memory_space<vmem>>, vector<1x1x2x128xf32>
    %23 = vector.shape_cast %22 : vector<1x1x2x128xf32> to vector<2x128xf32>
    %24 = arith.mulf %21, %23 : vector<2x128xf32>
    %25 = arith.addf %15, %24 : vector<2x128xf32>
    %26 = arith.mulf %21, %21 : vector<2x128xf32>
    %27 = arith.addf %17, %26 : vector<2x128xf32>
    %28 = arith.mulf %23, %23 : vector<2x128xf32>
    %29 = arith.addf %19, %28 : vector<2x128xf32>
    %cst = arith.constant 1.000000e-24 : f32
    %30 = vector.broadcast %cst : f32 to vector<2x128xf32>
    %31 = arith.maximumf %27, %30 : vector<2x128xf32>
    %cst_22 = arith.constant 1.000000e-24 : f32
    %32 = vector.broadcast %cst_22 : f32 to vector<2x128xf32>
    %33 = arith.maximumf %29, %32 : vector<2x128xf32>
    %34 = arith.mulf %31, %33 : vector<2x128xf32>
    %35 = math.rsqrt %34 : vector<2x128xf32>
    %36 = arith.mulf %25, %35 : vector<2x128xf32>
    %c0_23 = arith.constant 0 : index
    %c0_24 = arith.constant 0 : index
    %37 = vector.load %arg5[%c0_23, %c0_24] : memref<2x128xf32, #tpu.memory_space<vmem>>, vector<2x128xf32>
    %cst_25 = arith.constant 1.000000e+00 : f32
    %38 = vector.broadcast %cst_25 : f32 to vector<2x128xf32>
    %39 = arith.subf %38, %36 : vector<2x128xf32>
    %40 = arith.addf %37, %39 : vector<2x128xf32>
    %c0_26 = arith.constant 0 : index
    %c0_27 = arith.constant 0 : index
    %41 = vector.load %arg5[%c0_26, %c0_27] : memref<2x128xf32, #tpu.memory_space<vmem>>, vector<2x128xf32>
    tpu.vector_store %arg5[%c0_26, %c0_27], %40 {strides = array<i32>} : memref<2x128xf32, #tpu.memory_space<vmem>>, vector<2x128xf32>,
    %c0_i32_28 = arith.constant 0 : i32
    %42 = arith.cmpi eq, %arg1, %c0_i32_28 : i32
    %43 = arith.extui %42 : i1 to i32
    %c0_i32_29 = arith.constant 0 : i32
    %44 = arith.cmpi ne, %43, %c0_i32_29 : i32
    scf.if %44 {
      %c0_30 = arith.constant 0 : index
      %c0_31 = arith.constant 0 : index
      %45 = vector.load %arg5[%c0_30, %c0_31] : memref<2x128xf32, #tpu.memory_space<vmem>>, vector<2x128xf32>
      %cst_32 = arith.constant dense<0.000000e+00> : vector<128xf32>
      %46 = vector.multi_reduction <add>, %45, %cst_32 [0] : vector<2x128xf32> to vector<128xf32>
      %47 = vector.shape_cast %46 : vector<128xf32> to vector<1x128xf32>
      %48 = vector.shape_cast %47 : vector<1x128xf32> to vector<1x1x128xf32>
      %c0_33 = arith.constant 0 : index
      %c0_34 = arith.constant 0 : index
      %c0_35 = arith.constant 0 : index
      %49 = vector.load %arg4[%c0_33, %c0_34, %c0_35] : memref<1x1x128xf32, #tpu.memory_space<vmem>>, vector<1x1x128xf32>
      tpu.vector_store %arg4[%c0_33, %c0_34, %c0_35], %48 {strides = array<i32>} : memref<1x1x128xf32, #tpu.memory_space<vmem>>, vector<1x1x128xf32>,
    } else {
    }
    return
  }
  func.func @transform_0(%arg0: i32, %arg1: i32) -> (i32, i32, i32, i32) {
    %c0_i32 = arith.constant 0 : i32
    %c0_i32_0 = arith.constant 0 : i32
    %c0_i32_1 = arith.constant 0 : i32
    return %arg0, %c0_i32, %arg1, %c0_i32_0 : i32, i32, i32, i32
  }
  func.func @transform_1(%arg0: i32, %arg1: i32) -> (i32, i32, i32, i32) {
    %c0_i32 = arith.constant 0 : i32
    %c0_i32_0 = arith.constant 0 : i32
    %c0_i32_1 = arith.constant 0 : i32
    return %arg0, %c0_i32, %arg1, %c0_i32_0 : i32, i32, i32, i32
  }
  func.func @transform_2(%arg0: i32, %arg1: i32) -> (i32, i32, i32) {
    %c0_i32 = arith.constant 0 : i32
    %c0_i32_0 = arith.constant 0 : i32
    %c0_i32_1 = arith.constant 0 : i32
    return %arg0, %c0_i32, %c0_i32_0 : i32, i32, i32
  }
}

</mosaic_0001>

<llo_original>
// kernel: tpu_custom_call.1
$region0: #{tpu_custom_call.1}
  #allocation0 [shape = 'u32[]', space=smem, size = 0x4, offset = 0x4, fixed_abs, tag = 'smem constant byte address 0x4 - core index']
  #allocation1 [shape = 'u32[144,128]{1,0:T(1,128)}', space=vmem, size = 0x12000, scoped, tag = 'internal scratch']
  #allocation2 [shape = 'f32[2,128]{1,0:T(2,128)}', space=vmem, size = 0x400, scoped, tag = 'scratch operand']
  %s0 = inlined_call_operand.hbm [shape: f32[2,3,2,128], index: 0, kind: input, shape index: {}]
  %s1 = inlined_call_operand.hbm [shape: f32[2,3,2,128], index: 1, kind: input, shape index: {}]
  %s2 = inlined_call_operand.hbm [shape: f32[2,1,128], index: 2, kind: output, shape index: {}]
  %s3 = sld [smem:[#allocation0]]
  $region57: #{tpu_custom_call.1} parent=0
    _
  %s5 = ssub.s32 1, %s3
  %s6 = scalar_select 0, %s5, %s3
  $region1: #{tpu_custom_call.1} parent=0
    #allocation3 [shape = 'u8[6144]{0}', space=vmem, size = 0x1800, scoped, tag = 'input window, operand 0']
    #allocation4 [shape = 's32[2]{0}', space=sflag, size = 0x8, scoped, tag = 'scoped memory for tpu_custom_call.1']
    #allocation5 [shape = 's32[2]{0}', space=sflag, size = 0x8, scoped, tag = 'scoped memory for tpu_custom_call.1']
    #allocation6 [shape = 'u8[6144]{0}', space=vmem, size = 0x1800, scoped, tag = 'input window, operand 1']
    #allocation7 [shape = 's32[2]{0}', space=sflag, size = 0x8, scoped, tag = 'scoped memory for tpu_custom_call.1']
    #allocation8 [shape = 'u8[1024]{0}', space=vmem, size = 0x400, scoped, tag = 'output window, operand 0']
    %7 = vsyncpa [#allocation4], 0
    %s8 = scalar_lea.sflag [#allocation4], 1
    %9 = vsyncpa %s8, 0
    %10 = vsyncpa [#allocation7], 0
    %s11 = scalar_lea.sflag [#allocation7], 1
    %12 = vsyncpa %s11, 0
    %13 = vsyncpa [#allocation5], 0
    %s14 = scalar_lea.sflag [#allocation5], 1
    %15 = vsyncpa %s14, 0
    loop: start=0, step=1, limit=4
    $region2: #{tpu_custom_call.1} parent=1 // loop_pre_header
      _
    $region3: #{tpu_custom_call.1} parent=1 // loop_header
      %s17 = sphi 0, %s21
      %p18 = scmp.ge.s32.totalorder %s17, 4
      %s24 = sphi 0, %s36
      %s25 = sphi 0, %s32
      %s26 = sphi 0, %s24
      %s27 = sphi 0, %s25
      %s28 = sphi 0, %s26
      %s29 = sphi 0, %s27
      %s41 = sphi 0, %s43
      %s44 = sphi 0, %s41
      %s45 = sphi 0, %s44
      %s61 = sphi 0, %s45
      %s69 = sphi 0, %s71
      %s72 = sphi 0, %s69
      %s73 = sphi 0, %s72
      %s89 = sphi 0, %s73
      %s95 = sphi 0, %s97
      %s98 = sphi 0, %s95
      %s99 = sphi 0, %s98
      %s115 = sphi 0, %s99
    $region4: #{tpu_custom_call.1} parent=1 // loop_header_branch
      %20 = sbr.rel (%p18) target = $region8
    $region5: #{tpu_custom_call.1} parent=1 // loop_body
      %s22 = ssub.s32 %s17, 1
      %s23 = ssub.s32 %s17, 2
      %s30 = sadd.s32 1, %s25
      %p31 = scmp.ge.s32.totalorder %s30, 1
      %s32 = scalar_select %p31, 0, %s30
      %s33 = sadd.s32 1, %s24
      %s34 = scalar_select %p31, %s33, %s24
      %p35 = scmp.ge.s32.totalorder %s34, 2
      %s36 = scalar_select %p35, 0, %s34
      %s37 = ssub.s32 %s24, %s36
      %s38 = ssub.s32 %s25, %s32
      %s39 = sor.u32 %s37, %s38
      %p40 = scmp.eq.s32.totalorder %s39, 0
      %s42 = sadd.s32 %s41, 1
      %s43 = scalar_select %p40, %s41, %s42
      %p46 = pneg %p40
      %p47 = scmp.eq.s32.totalorder %s17, 1
      %p48 = por %p46, %p47
      %p49 = scmp.ne.s32.totalorder %s41, %s44
      %p50 = scmp.eq.s32.totalorder %s17, 0
      %p51 = por %p49, %p50
      %p52 = scmp.ne.s32.totalorder %s41, %s44
      %p53 = scmp.eq.s32.totalorder %s22, 1
      %p54 = por %p52, %p53
      %p55 = scmp.ne.s32.totalorder %s44, %s45
      %p56 = scmp.eq.s32.totalorder %s22, 0
      %p57 = por %p55, %p56
      %p58 = scmp.ne.s32.totalorder %s44, %s45
      %p59 = scmp.eq.s32.totalorder %s23, 1
      %p60 = por %p58, %p59
      %p62 = scmp.ne.s32.totalorder %s45, %s61
      %p63 = scmp.eq.s32.totalorder %s23, 0
      %p64 = por %p62, %p63
      %s65 = ssub.s32 %s24, %s36
      %s66 = ssub.s32 %s25, %s32
      %s67 = sor.u32 %s65, %s66
      %p68 = scmp.eq.s32.totalorder %s67, 0
      %s70 = sadd.s32 %s69, 1
      %s71 = scalar_select %p68, %s69, %s70
      %p74 = pneg %p68
      %p75 = scmp.eq.s32.totalorder %s17, 1
      %p76 = por %p74, %p75
      %p77 = scmp.ne.s32.totalorder %s69, %s72
      %p78 = scmp.eq.s32.totalorder %s17, 0
      %p79 = por %p77, %p78
      %p80 = scmp.ne.s32.totalorder %s69, %s72
      %p81 = scmp.eq.s32.totalorder %s22, 1
      %p82 = por %p80, %p81
      %p83 = scmp.ne.s32.totalorder %s72, %s73
      %p84 = scmp.eq.s32.totalorder %s22, 0
      %p85 = por %p83, %p84
      %p86 = scmp.ne.s32.totalorder %s72, %s73
      %p87 = scmp.eq.s32.totalorder %s23, 1
      %p88 = por %p86, %p87
      %p90 = scmp.ne.s32.totalorder %s73, %s89
      %p91 = scmp.eq.s32.totalorder %s23, 0
      %p92 = por %p90, %p91
      %s93 = ssub.s32 %s24, %s36
      %p94 = scmp.eq.s32.totalorder %s93, 0
      %s96 = sadd.s32 %s95, 1
      %s97 = scalar_select %p94, %s95, %s96
      %p100 = pneg %p94
      %p101 = scmp.eq.s32.totalorder %s17, 1
      %p102 = por %p100, %p101
      %p103 = scmp.ne.s32.totalorder %s95, %s98
      %p104 = scmp.eq.s32.totalorder %s17, 0
      %p105 = por %p103, %p104
      %p106 = scmp.ne.s32.totalorder %s95, %s98
      %p107 = scmp.eq.s32.totalorder %s22, 1
      %p108 = por %p106, %p107
      %p109 = scmp.ne.s32.totalorder %s98, %s99
      %p110 = scmp.eq.s32.totalorder %s22, 0
      %p111 = por %p109, %p110
      %p112 = scmp.ne.s32.totalorder %s98, %s99
      %p113 = scmp.eq.s32.totalorder %s23, 1
      %p114 = por %p112, %p113
      %p116 = scmp.ne.s32.totalorder %s99, %s115
      %p117 = scmp.eq.s32.totalorder %s23, 0
      %p118 = por %p116, %p117
      %p119 = scmp.le.s32.totalorder 1, %s17
      %p120 = scmp.lt.s32.totalorder %s17, 3
      %p121 = pnand %p119, %p120
      %p122 = pneg %p121
      // Predicated region
      $region9: #{tpu_custom_call.1} parent=5 // pred_check
        _
      $region10: #{tpu_custom_call.1} parent=5 // pred_check_branch
        %124 = sbr.rel (%p121) target = $region12
      $region11: #{tpu_custom_call.1} parent=5 // pred_region
        %s125 = ssub.s32 %s17, 1
      $region12: #{tpu_custom_call.1} parent=5 // pred_fallthru
        _
      %p126 = scmp.lt.s32.totalorder %s17, 2
      // Predicated region
      $region13: #{tpu_custom_call.1} parent=5 // pred_check
        %p127 = pneg %p126
      $region14: #{tpu_custom_call.1} parent=5 // pred_check_branch
        %129 = sbr.rel (%p127) target = $region16
      $region15: #{tpu_custom_call.1} parent=5 // pred_region
        // Predicated region
        $region17: #{tpu_custom_call.1} parent=15 // pred_check
          %p130 = pneg %p51
        $region18: #{tpu_custom_call.1} parent=15 // pred_check_branch
          %132 = sbr.rel (%p130) target = $region20
        $region19: #{tpu_custom_call.1} parent=15 // pred_region
          %s133 = sand.u32 %s41, 1
          %s134 = scalar_lea.sflag [#allocation4], %s133
          %s135 = sand.u32 %s41, 1
          %s136 = smul.addr %s135, 6
          %s137 = scalar_lea.vmem [#allocation3], %s136
          %s139 = ssub.s32 96, 96
          %140 = vsyncadd %s134, %s139
          %s141 = smul.addr %s24, 3
          %s142 = sadd.s32 %s25, %s141
          %s143 = smul.addr %s142, 32
          %s144 = scalar_lea.hbm %s0, %s143
          %s145 = sshll.u32 %s137, 4
          %s146 = int_to_ptr.vmem [resolvable:$true] %s145
          %151 = dma.hbm_to_vmem [thread:$0]  %s144, 96, %s146, %s134, 32, 32, 2
        $region20: #{tpu_custom_call.1} parent=15 // pred_fallthru
          _
        // Predicated region
        $region21: #{tpu_custom_call.1} parent=15 // pred_check
          %p152 = pneg %p79
        $region22: #{tpu_custom_call.1} parent=15 // pred_check_branch
          %154 = sbr.rel (%p152) target = $region24
        $region23: #{tpu_custom_call.1} parent=15 // pred_region
          %s155 = sand.u32 %s69, 1
          %s156 = scalar_lea.sflag [#allocation7], %s155
          %s157 = sand.u32 %s69, 1
          %s158 = smul.addr %s157, 6
          %s159 = scalar_lea.vmem [#allocation6], %s158
          %s161 = ssub.s32 96, 96
          %162 = vsyncadd %s156, %s161
          %s163 = smul.addr %s24, 3
          %s164 = sadd.s32 %s25, %s163
          %s165 = smul.addr %s164, 32
          %s166 = scalar_lea.hbm %s1, %s165
          %s167 = sshll.u32 %s159, 4
          %s168 = int_to_ptr.vmem [resolvable:$true] %s167
          %173 = dma.hbm_to_vmem [thread:$0]  %s166, 96, %s168, %s156, 32, 32, 2
        $region24: #{tpu_custom_call.1} parent=15 // pred_fallthru
          _
      $region16: #{tpu_custom_call.1} parent=5 // pred_fallthru
        _
      %p174 = scmp.le.s32.totalorder 1, %s17
      %p175 = scmp.lt.s32.totalorder %s17, 3
      %p176 = pnand %p174, %p175
      %p177 = pneg %p176
      // Predicated region
      $region25: #{tpu_custom_call.1} parent=5 // pred_check
        _
      $region26: #{tpu_custom_call.1} parent=5 // pred_check_branch
        %179 = sbr.rel (%p176) target = $region28
      $region27: #{tpu_custom_call.1} parent=5 // pred_region
        %s180 = ssub.s32 %s17, 1
        %s181 = sand.u32 %s44, 1
        %s182 = scalar_lea.sflag [#allocation4], %s181
        %s183 = sand.u32 %s44, 1
        %s184 = smul.addr %s183, 6
        %s185 = scalar_lea.vmem [#allocation3], %s184
        // Predicated region
        $region29: #{tpu_custom_call.1} parent=27 // pred_check
          %p186 = pneg %p57
        $region30: #{tpu_custom_call.1} parent=27 // pred_check_branch
          %188 = sbr.rel (%p186) target = $region32
        $region31: #{tpu_custom_call.1} parent=27 // pred_region
          %189 = dma.done %s182, 96
        $region32: #{tpu_custom_call.1} parent=27 // pred_fallthru
          _
        %s190 = sand.u32 %s72, 1
        %s191 = scalar_lea.sflag [#allocation7], %s190
        %s192 = sand.u32 %s72, 1
        %s193 = smul.addr %s192, 6
        %s194 = scalar_lea.vmem [#allocation6], %s193
        // Predicated region
        $region33: #{tpu_custom_call.1} parent=27 // pred_check
          %p195 = pneg %p85
        $region34: #{tpu_custom_call.1} parent=27 // pred_check_branch
          %197 = sbr.rel (%p195) target = $region36
        $region35: #{tpu_custom_call.1} parent=27 // pred_region
          %198 = dma.done %s191, 96
        $region36: #{tpu_custom_call.1} parent=27 // pred_fallthru
          _
        %s199 = sand.u32 %s44, 1
        %s200 = scalar_lea.sflag [#allocation4], %s199
        %s201 = sand.u32 %s44, 1
        %s202 = smul.addr %s201, 6
        %s203 = scalar_lea.vmem [#allocation3], %s202
        %p204 = pneg %p57
        %p205 = pneg %p54
        %s206 = sand.u32 %s72, 1
        %s207 = scalar_lea.sflag [#allocation7], %s206
        %s208 = sand.u32 %s72, 1
        %s209 = smul.addr %s208, 6
        %s210 = scalar_lea.vmem [#allocation6], %s209
        %p211 = pneg %p85
        %p212 = pneg %p82
        %p213 = pneg %p111
        %p214 = pneg %p108
        %s215 = sand.u32 %s98, 1
        %s216 = scalar_lea.sflag [#allocation5], %s215
        %s217 = sand.u32 %s98, 1
        %s218 = scalar_lea.vmem [#allocation8], %s217
        %p219 = scmp.eq.s32.totalorder %s27, 0
        // Predicated region
        $region37: #{tpu_custom_call.1} parent=27 // pred_check
          %p220 = pneg %p219
        $region38: #{tpu_custom_call.1} parent=27 // pred_check_branch
          %222 = sbr.rel (%p220) target = $region40
        $region39: #{tpu_custom_call.1} parent=27 // pred_region
          %223 = vst [vmem:[#allocation2] sm:$0x3] 0.0
        $region40: #{tpu_custom_call.1} parent=27 // pred_fallthru
          _
        %v224 = vld [vmem:[%s185] sm:$0x3]
        %v225 = vld [vmem:[%s194] sm:$0x3]
        %v226 = vmul.f32 %v224, %v225
        %v227 = vmul.f32 %v224, %v224
        %v228 = vmul.f32 %v225, %v225
        %s229 = scalar_lea.vmem %s185, 2 [#allocation3]
        %v230 = vld [vmem:[%s229] sm:$0x3]
        %s231 = scalar_lea.vmem %s194, 2 [#allocation6]
        %v232 = vld [vmem:[%s231] sm:$0x3]
        %v233 = vmul.f32 %v230, %v232
        %v234 = vadd.f32 %v226, %v233
        %v235 = vmul.f32 %v230, %v230
        %v236 = vadd.f32 %v227, %v235
        %v237 = vmul.f32 %v232, %v232
        %v238 = vadd.f32 %v228, %v237
        %s239 = scalar_lea.vmem %s185, 4 [#allocation3]
        %v240 = vld [vmem:[%s239] sm:$0x3]
        %s241 = scalar_lea.vmem %s194, 4 [#allocation6]
        %v242 = vld [vmem:[%s241] sm:$0x3]
        %v243 = vmul.f32 %v240, %v242
        %v244 = vadd.f32 %v234, %v243
        %v245 = vmul.f32 %v240, %v240
        %v246 = vadd.f32 %v236, %v245
        %v247 = vmul.f32 %v242, %v242
        %v248 = vadd.f32 %v238, %v247
        %v249 = vmax.f32 %v246, 1e-24
        %v250 = vmax.f32 %v248, 1e-24
        %v251 = vmul.f32 %v249, %v250
        %v252 = vrsqrt.pop %v251
        %v253 = vmul.f32 %v244, %v252
        %v254 = vld [vmem:[#allocation2] sm:$0x3]
        %v255 = vsub.f32 1.0, %v253
        %v256 = vadd.f32 %v254, %v255
        %257 = vst [vmem:[#allocation2] sm:$0x3] %v256
        // Predicated region
        $region41: #{tpu_custom_call.1} parent=27 // pred_check
          %p258 = pneg %p219
        $region42: #{tpu_custom_call.1} parent=27 // pred_check_branch
          %260 = sbr.rel (%p258) target = $region44
        $region43: #{tpu_custom_call.1} parent=27 // pred_region
          %v261 = vld [vmem:[#allocation2] sm:$0x3]
          %vm262 = vcmask 1041408
          %v263 = vsel %vm262, %v261, 0.0
          %v264 = vrot.slane %v263, 4
          %v265 = vadd.f32 %v263, %v264
          %v266 = vrot.slane %v265, 2
          %v267 = vadd.f32 %v265, %v266
          %v268 = vrot.slane %v267, 1
          %v269 = vadd.f32 %v267, %v268
          %270 = vst [vmem:[%s218] sm:$0x1] %v269
        $region44: #{tpu_custom_call.1} parent=27 // pred_fallthru
          _
        %s271 = sand.u32 %s98, 1
        %s272 = scalar_lea.sflag [#allocation5], %s271
        %s273 = sand.u32 %s98, 1
        %s274 = scalar_lea.vmem [#allocation8], %s273
        // Predicated region
        $region45: #{tpu_custom_call.1} parent=27 // pred_check
          %p275 = pneg %p108
        $region46: #{tpu_custom_call.1} parent=27 // pred_check_branch
          %277 = sbr.rel (%p275) target = $region48
        $region47: #{tpu_custom_call.1} parent=27 // pred_region
          %s279 = ssub.s32 16, 16
          %280 = vsyncadd %s272, %s279
          %s281 = smul.addr %s26, 16
          %s282 = scalar_lea.hbm %s2, %s281
          %s284 = sshll.u32 %s274, 4
          %s285 = int_to_ptr.vmem [resolvable:$true] %s284
          %287 = dma.vmem_to_hbm [thread:$0]  %s285, 16, %s282, %s272
        $region48: #{tpu_custom_call.1} parent=27 // pred_fallthru
          _
      $region28: #{tpu_custom_call.1} parent=5 // pred_fallthru
        _
      %p288 = scmp.le.s32.totalorder 2, %s17
      // Predicated region
      $region49: #{tpu_custom_call.1} parent=5 // pred_check
        %p289 = pneg %p288
      $region50: #{tpu_custom_call.1} parent=5 // pred_check_branch
        %291 = sbr.rel (%p289) target = $region52
      $region51: #{tpu_custom_call.1} parent=5 // pred_region
        %s292 = ssub.s32 %s17, 2
        // Predicated region
        $region53: #{tpu_custom_call.1} parent=51 // pred_check
          %p293 = pneg %p114
        $region54: #{tpu_custom_call.1} parent=51 // pred_check_branch
          %295 = sbr.rel (%p293) target = $region56
        $region55: #{tpu_custom_call.1} parent=51 // pred_region
          %s296 = sand.u32 %s99, 1
          %s297 = scalar_lea.sflag [#allocation5], %s296
          %s298 = sand.u32 %s99, 1
          %s299 = scalar_lea.vmem [#allocation8], %s298
          %300 = dma.done %s297, 16
        $region56: #{tpu_custom_call.1} parent=51 // pred_fallthru
          _
      $region52: #{tpu_custom_call.1} parent=5 // pred_fallthru
        _
    $region6: #{tpu_custom_call.1} parent=1 // loop_footer
      %s21 = sadd.s32 1, %s17
    $region7: #{tpu_custom_call.1} parent=1 // loop_footer_branch
      %16 = sbr.rel target = $region3
    $region8: #{tpu_custom_call.1} parent=1 // loop_exit
      _
    %301 = vsyncpa [#allocation4], 1
    %s302 = scalar_lea.sflag [#allocation4], 1
    %303 = vsyncpa %s302, 1
    %304 = vsyncpa [#allocation7], 1
    %s305 = scalar_lea.sflag [#allocation7], 1
    %306 = vsyncpa %s305, 1
    %307 = vsyncpa [#allocation5], 1
    %s308 = scalar_lea.sflag [#allocation5], 1
    %309 = vsyncpa %s308, 1

</llo_original>
